<compile_context>
chip_gen: v7x
topology: tpu7x:2x2x1
jax: 0.10.0
libtpu: 0.0.40
codegen_flags: <defaults>
</compile_context>

<pallas_src>
import functools

import numpy as np
import jax
import jax.numpy as jnp
from jax.experimental import pallas as pl
from jax.experimental.pallas import tpu as pltpu

LOG_STD_MAX = 2.0
LOG_STD_MIN = -20.0


def _round_up(n, m):
    return ((n + m - 1) // m) * m


def _bucket_batch(b):
    """Static batch buckets: next pow-2 (>=8) up to 512, then multiples of 512."""
    b = int(b)
    if b <= 512:
        return max(8, 1 << max(0, (b - 1).bit_length()))
    return _round_up(b, 512)


# ----------------------------- Pallas kernel ------------------------------- #

def _fused_kernel(obs_ref, w1_ref, w2_ref, w3_ref, b_ref, out_ref, *,
                  act_dim, hid_pad, out_pad):
    """One fused actor+critic forward for a (tile_b, obs_pad) obs block.

    W1: (obs_pad, hid_pad)  = [w1_actor | w1_critic] (zero padded)
    W2: (hid_pad, hid_pad)  = blockdiag(w2_actor, w2_critic)
    W3: (hid_pad, out_pad)  = [w3_mean | w4_logstd | w3_critic | 0...]
    bias slab (8, bias_w): row0=b1, row1=b2, row2=b3-head, row3=action_bound.
    Output slab (tile_b, out_pad): cols [0:A)=mean, [A:2A)=std, [2A]=value.
    """
    bias = b_ref[...]
    h = jnp.tanh(
        jnp.dot(obs_ref[...], w1_ref[...], preferred_element_type=jnp.float32)
        + bias[0:1, :hid_pad])
    h = jnp.tanh(
        jnp.dot(h, w2_ref[...], preferred_element_type=jnp.float32)
        + bias[1:2, :hid_pad])
    z = (jnp.dot(h, w3_ref[...], preferred_element_type=jnp.float32)
         + bias[2:3, :out_pad])

    bound = bias[3:4, :out_pad]
    mean = bound * jnp.tanh(z)
    std = jnp.exp(jnp.clip(z, LOG_STD_MIN, LOG_STD_MAX))

    lane = jax.lax.broadcasted_iota(jnp.int32, z.shape, dimension=1)
    out_ref[...] = jnp.where(lane < act_dim, mean,
                             jnp.where(lane < 2 * act_dim, std, z))


@functools.lru_cache(maxsize=None)
def _build_fused_call(b_pad, obs_pad, hid_pad, out_pad, bias_w, act_dim):
    tb = min(b_pad, 512)                      # batch tile; divides b_pad by bucketing
    kernel = functools.partial(_fused_kernel, act_dim=act_dim,
                               hid_pad=hid_pad, out_pad=out_pad)
    call = pl.pallas_call(
        kernel,
        out_shape=jax.ShapeDtypeStruct((b_pad, out_pad), jnp.float32),
        grid_spec=pltpu.PrefetchScalarGridSpec(
            num_scalar_prefetch=0,
            grid=(b_pad // tb,),
            in_specs=[
                pl.BlockSpec((tb, obs_pad), lambda i: (i, 0)),       # obs tile
                pl.BlockSpec((obs_pad, hid_pad), lambda i: (0, 0)),  # W1 resident
                pl.BlockSpec((hid_pad, hid_pad), lambda i: (0, 0)),  # W2 resident
                pl.BlockSpec((hid_pad, out_pad), lambda i: (0, 0)),  # W3 resident
                pl.BlockSpec((8, bias_w), lambda i: (0, 0)),         # bias slab
            ],
            out_specs=pl.BlockSpec((tb, out_pad), lambda i: (i, 0)),
        ),
        compiler_params=pltpu.CompilerParams(
            dimension_semantics=("parallel",)),
    )
    return jax.jit(call)


def fused_forward(obs_np, params):
    """obs_np: (B, obs_dim) numpy -> (device slab (B_pad, out_pad), B)."""
    obs_dim, act_dim, _, obs_pad, hid_pad, out_pad, bias_w = params["meta"]
    B = obs_np.shape[0]
    b_pad = _bucket_batch(B)
    obs_p = np.zeros((b_pad, obs_pad), np.float32)
    obs_p[:B, :obs_dim] = obs_np
    call = _build_fused_call(b_pad, obs_pad, hid_pad, out_pad, bias_w, act_dim)
    slab = call(jnp.asarray(obs_p), params["w1"], params["w2"],
                params["w3"], params["bias"])
    return slab, B


# ------------------------- parameter initialization ------------------------ #

def _linear(key, in_dim, out_dim):
    kw, kb = jax.random.split(key)
    bnd = 1.0 / np.sqrt(in_dim)
    w = np.asarray(jax.random.uniform(kw, (in_dim, out_dim), jnp.float32, -bnd, bnd))
    b = np.asarray(jax.random.uniform(kb, (out_dim,), jnp.float32, -bnd, bnd))
    return w, b


def init_mode_params(key, obs_dim, act_dim, hidden_dim, action_bound):
    ka1, ka2, ka3, ka4, kc1, kc2, kc3 = jax.random.split(key, 7)
    w1, b1 = _linear(ka1, obs_dim, hidden_dim)        # actor
    w2, b2 = _linear(ka2, hidden_dim, hidden_dim)
    w3, b3 = _linear(ka3, hidden_dim, act_dim)
    w4, b4 = _linear(ka4, hidden_dim, act_dim)
    cw1, cb1 = _linear(kc1, obs_dim, hidden_dim)      # critic
    cw2, cb2 = _linear(kc2, hidden_dim, hidden_dim)
    cw3, cb3 = _linear(kc3, hidden_dim, 1)

    H, A = hidden_dim, act_dim
    obs_pad = _round_up(obs_dim, 128)
    hid_pad = _round_up(2 * H, 128)
    out_pad = _round_up(2 * A + 1, 128)
    bias_w = max(hid_pad, out_pad)
    bound = np.asarray(action_bound, np.float32).reshape(A)

    W1 = np.zeros((obs_pad, hid_pad), np.float32)
    W1[:obs_dim, :H] = w1
    W1[:obs_dim, H:2 * H] = cw1
    W2 = np.zeros((hid_pad, hid_pad), np.float32)
    W2[:H, :H] = w2
    W2[H:2 * H, H:2 * H] = cw2
    W3 = np.zeros((hid_pad, out_pad), np.float32)
    W3[:H, :A] = w3
    W3[:H, A:2 * A] = w4
    W3[H:2 * H, 2 * A:2 * A + 1] = cw3
    Bslab = np.zeros((8, bias_w), np.float32)
    Bslab[0, :H] = b1
    Bslab[0, H:2 * H] = cb1
    Bslab[1, :H] = b2
    Bslab[1, H:2 * H] = cb2
    Bslab[2, :A] = b3
    Bslab[2, A:2 * A] = b4
    Bslab[2, 2 * A] = cb3[0]
    Bslab[3, :A] = bound

    raw = dict(w1=jnp.asarray(w1), b1=jnp.asarray(b1), w2=jnp.asarray(w2),
               b2=jnp.asarray(b2), w3=jnp.asarray(w3), b3=jnp.asarray(b3),
               w4=jnp.asarray(w4), b4=jnp.asarray(b4),
               cw1=jnp.asarray(cw1), cb1=jnp.asarray(cb1),
               cw2=jnp.asarray(cw2), cb2=jnp.asarray(cb2),
               cw3=jnp.asarray(cw3), cb3=jnp.asarray(cb3),
               bound=jnp.asarray(bound.reshape(1, A)))
    return dict(w1=jnp.asarray(W1), w2=jnp.asarray(W2), w3=jnp.asarray(W3),
                bias=jnp.asarray(Bslab),
                meta=(obs_dim, act_dim, hidden_dim, obs_pad, hid_pad, out_pad, bias_w),
                raw=raw)


# ------------------------------ Model (glue) ------------------------------- #

class Model:
    """Per-mode fused Actor/Critic MLPs; hot path is one Pallas kernel per mode."""

    def __init__(self, mode_specs, hidden_dim, key):
        # mode_specs: {mode_name: (obs_dim, act_dim, action_bound)}
        self.params = {}
        for mname, (obs_dim, act_dim, a_bound) in mode_specs.items():
            key, k = jax.random.split(key)
            self.params[mname] = init_mode_params(k, obs_dim, act_dim,
                                                  hidden_dim, a_bound)

    @staticmethod
    def group_by_modes(obs, modes):
        obs_map = {}
        for mode, o in zip(modes, obs):
            o = np.asarray(o, np.float32).reshape(1, -1)
            obs_map[mode] = o if mode not in obs_map else np.concatenate(
                [obs_map[mode], o])
        return obs_map

    @staticmethod
    def ungroup(values, modes):
        ret, counts = [], {m: 0 for m in values}
        for mode in modes:
            ret.append(values[mode][counts[mode]])
            counts[mode] += 1
        return ret

    def forward(self, obs, modes):
        """Single device pass per mode group; returns (means, stds, values)."""
        obs_map = self.group_by_modes(obs, modes)
        # Launch all mode groups first (keeps device queue full), then sync once.
        slabs = {m: fused_forward(o, self.params[m]) for m, o in obs_map.items()}
        jax.block_until_ready([s for s, _ in slabs.values()])

        means, stds, vals = {}, {}, {}
        for m, (slab, B) in slabs.items():
            ad = self.params[m]["meta"][1]
            s = np.asarray(slab)                 # single D2H per mode group
            means[m] = s[:B, :ad]
            stds[m] = s[:B, ad:2 * ad]
            vals[m] = s[:B, 2 * ad]
        mean_out = np.stack(self.ungroup(means, modes))   # (B, act_dim)
        std_out = np.stack(self.ungroup(stds, modes))     # (B, act_dim)
        val_out = np.asarray(self.ungroup(vals, modes))   # (B,)
        return mean_out, std_out, val_out

    def actor_outputs(self, obs, modes):
        m, s, _ = self.forward(obs, modes)
        return m, s

    def get_values(self, obs, modes):
        _, _, v = self.forward(obs, modes)
        return v


# ------------------------------- reference --------------------------------- #

def actor_critic_ref(obs, r):
    h = jnp.tanh(obs @ r["w1"] + r["b1"])
    h = jnp.tanh(h @ r["w2"] + r["b2"])
    mean = r["bound"] * jnp.tanh(h @ r["w3"] + r["b3"])
    std = jnp.exp(jnp.clip(h @ r["w4"] + r["b4"], LOG_STD_MIN, LOG_STD_MAX))
    hc = jnp.tanh(obs @ r["cw1"] + r["cb1"])
    hc = jnp.tanh(hc @ r["cw2"] + r["cb2"])
    value = hc @ r["cw3"] + r["cb3"]
    return mean, std, value


# --------------------------------- main ------------------------------------ #

if __name__ == "__main__":
    key = jax.random.PRNGKey(0)

    OBS_DIM, ACT_DIM, HIDDEN = 8, 4, 32
    mode_specs = {
        "normal": (OBS_DIM, ACT_DIM, np.full((ACT_DIM,), 1.5, np.float32)),
        "safe":   (OBS_DIM, ACT_DIM, np.full((ACT_DIM,), 0.5, np.float32)),
    }
    key, kmodel, kobs = jax.random.split(key, 3)
    model = Model(mode_specs, HIDDEN, kmodel)

    batch = 8
    obs = np.asarray(jax.random.normal(kobs, (batch, OBS_DIM), jnp.float32))
    modes = ["normal", "safe"] * (batch // 2)

    # Pallas-backed fused forward (actor mean/std + critic value in one pass).
    means, stds, values = model.forward(obs, modes)
    jax.block_until_ready((jnp.asarray(means), jnp.asarray(values)))

    # Reference (plain JAX on the un-fused raw parameters, same grouping).
    obs_map = Model.group_by_modes(obs, modes)
    ref_means, ref_stds, ref_vals = {}, {}, {}
    for mode, o in obs_map.items():
        oj = jnp.asarray(o, jnp.float32)
        m, s, v = actor_critic_ref(oj, model.params[mode]["raw"])
        ref_means[mode] = np.asarray(m)
        ref_stds[mode] = np.asarray(s)
        ref_vals[mode] = np.asarray(v)[:, 0]
    ref_mean_out = np.stack(Model.ungroup(ref_means, modes))
    ref_std_out = np.stack(Model.ungroup(ref_stds, modes))
    ref_val_out = np.asarray(Model.ungroup(ref_vals, modes))

    np.testing.assert_allclose(means, ref_mean_out, rtol=1e-5, atol=1e-5)
    np.testing.assert_allclose(stds, ref_std_out, rtol=1e-5, atol=1e-5)
    np.testing.assert_allclose(values, ref_val_out, rtol=1e-5, atol=1e-5)

    print("KERNEL_OK")
</pallas_src>

<mosaic_0001>
module attributes {stable_mosaic.version = 11 : i64} {
  func.func @_fused_kernel(%arg0: i32, %arg1: memref<8x128xf32, #tpu.memory_space<vmem>>, %arg2: memref<128x128xf32, #tpu.memory_space<vmem>>, %arg3: memref<128x128xf32, #tpu.memory_space<vmem>>, %arg4: memref<128x128xf32, #tpu.memory_space<vmem>>, %arg5: memref<8x128xf32, #tpu.memory_space<vmem>>, %arg6: memref<8x128xf32, #tpu.memory_space<vmem>>) attributes {dimension_semantics = [#tpu.dimension_semantics<parallel>], iteration_bounds = array<i64: 1>, scalar_prefetch = 0 : i64, scratch_operands = 0 : i64, tpu.core_type = #tpu.core_type<tc>, window_params = [{transform_indices = @transform_0, window_bounds = array<i64: 8, 128>}, {pipeline_mode = #tpu.pipeline_mode<synchronous>, transform_indices = @transform_1, window_bounds = array<i64: 128, 128>}, {pipeline_mode = #tpu.pipeline_mode<synchronous>, transform_indices = @transform_2, window_bounds = array<i64: 128, 128>}, {pipeline_mode = #tpu.pipeline_mode<synchronous>, transform_indices = @transform_3, window_bounds = array<i64: 128, 128>}, {pipeline_mode = #tpu.pipeline_mode<synchronous>, transform_indices = @transform_4, window_bounds = array<i64: 8, 128>}, {transform_indices = @transform_5, window_bounds = array<i64: 8, 128>}]} {
    %c0 = arith.constant 0 : index
    %c0_0 = arith.constant 0 : index
    %0 = vector.load %arg5[%c0, %c0_0] : memref<8x128xf32, #tpu.memory_space<vmem>>, vector<8x128xf32>
    %c0_1 = arith.constant 0 : index
    %c0_2 = arith.constant 0 : index
    %1 = vector.load %arg1[%c0_1, %c0_2] : memref<8x128xf32, #tpu.memory_space<vmem>>, vector<8x128xf32>
    %c0_3 = arith.constant 0 : index
    %c0_4 = arith.constant 0 : index
    %2 = vector.load %arg2[%c0_3, %c0_4] : memref<128x128xf32, #tpu.memory_space<vmem>>, vector<128x128xf32>
    %cst = arith.constant dense<0.000000e+00> : vector<8x128xf32>
    %3 = tpu.matmul %1, %2, %cst {dimension_numbers = #tpu.dot_dimension_numbers<[1], [0], [0], [1], [0, 0, 1, 1], [], []>} : vector<8x128xf32>, vector<128x128xf32>, vector<8x128xf32> -> vector<8x128xf32>
    %4 = vector.extract_strided_slice %0 {offsets = [0, 0], sizes = [1, 128], strides = [1, 1]} : vector<8x128xf32> to vector<1x128xf32>
    %5 = vector.broadcast %4 : vector<1x128xf32> to vector<8x128xf32>
    %6 = arith.addf %3, %5 : vector<8x128xf32>
    %7 = math.tanh %6 : vector<8x128xf32>
    %c0_5 = arith.constant 0 : index
    %c0_6 = arith.constant 0 : index
    %8 = vector.load %arg3[%c0_5, %c0_6] : memref<128x128xf32, #tpu.memory_space<vmem>>, vector<128x128xf32>
    %cst_7 = arith.constant dense<0.000000e+00> : vector<8x128xf32>
    %9 = tpu.matmul %7, %8, %cst_7 {dimension_numbers = #tpu.dot_dimension_numbers<[1], [0], [0], [1], [0, 0, 1, 1], [], []>} : vector<8x128xf32>, vector<128x128xf32>, vector<8x128xf32> -> vector<8x128xf32>
    %10 = vector.extract_strided_slice %0 {offsets = [1, 0], sizes = [1, 128], strides = [1, 1]} : vector<8x128xf32> to vector<1x128xf32>
    %11 = vector.broadcast %10 : vector<1x128xf32> to vector<8x128xf32>
    %12 = arith.addf %9, %11 : vector<8x128xf32>
    %13 = math.tanh %12 : vector<8x128xf32>
    %c0_8 = arith.constant 0 : index
    %c0_9 = arith.constant 0 : index
    %14 = vector.load %arg4[%c0_8, %c0_9] : memref<128x128xf32, #tpu.memory_space<vmem>>, vector<128x128xf32>
    %cst_10 = arith.constant dense<0.000000e+00> : vector<8x128xf32>
    %15 = tpu.matmul %13, %14, %cst_10 {dimension_numbers = #tpu.dot_dimension_numbers<[1], [0], [0], [1], [0, 0, 1, 1], [], []>} : vector<8x128xf32>, vector<128x128xf32>, vector<8x128xf32> -> vector<8x128xf32>
    %16 = vector.extract_strided_slice %0 {offsets = [2, 0], sizes = [1, 128], strides = [1, 1]} : vector<8x128xf32> to vector<1x128xf32>
    %17 = vector.broadcast %16 : vector<1x128xf32> to vector<8x128xf32>
    %18 = arith.addf %15, %17 : vector<8x128xf32>
    %19 = vector.extract_strided_slice %0 {offsets = [3, 0], sizes = [1, 128], strides = [1, 1]} : vector<8x128xf32> to vector<1x128xf32>
    %20 = math.tanh %18 : vector<8x128xf32>
    %21 = vector.broadcast %19 : vector<1x128xf32> to vector<8x128xf32>
    %22 = arith.mulf %21, %20 : vector<8x128xf32>
    %cst_11 = arith.constant -2.000000e+01 : f32
    %cst_12 = arith.constant 2.000000e+00 : f32
    %23 = vector.broadcast %cst_11 : f32 to vector<8x128xf32>
    %24 = arith.maximumf %23, %18 : vector<8x128xf32>
    %25 = vector.broadcast %cst_12 : f32 to vector<8x128xf32>
    %26 = arith.minimumf %25, %24 : vector<8x128xf32>
    %27 = math.exp %26 : vector<8x128xf32>
    %28 = tpu.iota {dimensions = array<i32: 1>} : vector<8x128xi32>
    %c4_i32 = arith.constant 4 : i32
    %29 = vector.broadcast %c4_i32 : i32 to vector<8x128xi32>
    %30 = arith.cmpi slt, %28, %29 : vector<8x128xi32>
    %c8_i32 = arith.constant 8 : i32
    %31 = vector.broadcast %c8_i32 : i32 to vector<8x128xi32>
    %32 = arith.cmpi slt, %28, %31 : vector<8x128xi32>
    %33 = arith.select %32, %27, %18 : vector<8x128xi1>, vector<8x128xf32>
    %34 = arith.select %30, %22, %33 : vector<8x128xi1>, vector<8x128xf32>
    %c0_13 = arith.constant 0 : index
    %c0_14 = arith.constant 0 : index
    %35 = vector.load %arg6[%c0_13, %c0_14] : memref<8x128xf32, #tpu.memory_space<vmem>>, vector<8x128xf32>
    tpu.vector_store %arg6[%c0_13, %c0_14], %34 {strides = array<i32>} : memref<8x128xf32, #tpu.memory_space<vmem>>, vector<8x128xf32>,
    return
  }
  func.func @transform_0(%arg0: i32) -> (i32, i32) {
    %c0_i32 = arith.constant 0 : i32
    %c0_i32_0 = arith.constant 0 : i32
    return %arg0, %c0_i32 : i32, i32
  }
  func.func @transform_1(%arg0: i32) -> (i32, i32) {
    %c0_i32 = arith.constant 0 : i32
    %c0_i32_0 = arith.constant 0 : i32
    %c0_i32_1 = arith.constant 0 : i32
    return %c0_i32, %c0_i32_0 : i32, i32
  }
  func.func @transform_2(%arg0: i32) -> (i32, i32) {
    %c0_i32 = arith.constant 0 : i32
    %c0_i32_0 = arith.constant 0 : i32
    %c0_i32_1 = arith.constant 0 : i32
    return %c0_i32, %c0_i32_0 : i32, i32
  }
  func.func @transform_3(%arg0: i32) -> (i32, i32) {
    %c0_i32 = arith.constant 0 : i32
    %c0_i32_0 = arith.constant 0 : i32
    %c0_i32_1 = arith.constant 0 : i32
    return %c0_i32, %c0_i32_0 : i32, i32
  }
  func.func @transform_4(%arg0: i32) -> (i32, i32) {
    %c0_i32 = arith.constant 0 : i32
    %c0_i32_0 = arith.constant 0 : i32
    %c0_i32_1 = arith.constant 0 : i32
    return %c0_i32, %c0_i32_0 : i32, i32
  }
  func.func @transform_5(%arg0: i32) -> (i32, i32) {
    %c0_i32 = arith.constant 0 : i32
    %c0_i32_0 = arith.constant 0 : i32
    return %arg0, %c0_i32 : i32, i32
  }
}

</mosaic_0001>

<llo_original>
// kernel: tpu_custom_call.1
$region0: #{tpu_custom_call.1}
  #allocation0 [shape = 'u32[]', space=smem, size = 0x4, offset = 0x4, fixed_abs, tag = 'smem constant byte address 0x4 - core index']
  #allocation1 [shape = 'u32[144,128]{1,0:T(1,128)}', space=vmem, size = 0x12000, scoped, tag = 'internal scratch']
  %s0 = inlined_call_operand.hbm [shape: f32[8,128], index: 0, kind: input, shape index: {}]
  %s1 = inlined_call_operand.hbm [shape: f32[128,128], index: 1, kind: input, shape index: {}]
  %s2 = inlined_call_operand.hbm [shape: f32[128,128], index: 2, kind: input, shape index: {}]
  %s3 = inlined_call_operand.hbm [shape: f32[128,128], index: 3, kind: input, shape index: {}]
  %s4 = inlined_call_operand.vmem [shape: f32[8,128], index: 4, kind: input, shape index: {}]
  %s5 = inlined_call_operand.hbm [shape: f32[8,128], index: 5, kind: output, shape index: {}]
  %s6 = sld [smem:[#allocation0]]
  $region46: #{tpu_custom_call.1} parent=0
    _
  %s8 = ssub.s32 1, %s6
  %s9 = scalar_select 0, %s8, %s6
  $region1: #{tpu_custom_call.1} parent=0
    #allocation2 [shape = 'u8[4096]{0}', space=vmem, size = 0x1000, scoped, tag = 'input window, operand 0, single buffered']
    #allocation3 [shape = 's32[1]{0}', space=sflag, size = 0x4, scoped, tag = 'scoped memory for tpu_custom_call.1']
    #allocation4 [shape = 's32[1]{0}', space=sflag, size = 0x4, scoped, tag = 'scoped memory for tpu_custom_call.1']
    #allocation5 [shape = 'u8[65536]{0}', space=vmem, size = 0x10000, scoped, tag = 'input window, operand 1, single buffered']
    #allocation6 [shape = 's32[1]{0}', space=sflag, size = 0x4, scoped, tag = 'scoped memory for tpu_custom_call.1']
    #allocation7 [shape = 'u8[65536]{0}', space=vmem, size = 0x10000, scoped, tag = 'input window, operand 2, single buffered']
    #allocation8 [shape = 'u8[65536]{0}', space=vmem, size = 0x10000, scoped, tag = 'input window, operand 3, single buffered']
    #allocation9 [shape = 's32[1]{0}', space=sflag, size = 0x4, scoped, tag = 'scoped memory for tpu_custom_call.1']
    #allocation10 [shape = 'u8[4096]{0}', space=vmem, size = 0x1000, scoped, tag = 'output window, operand 0, single buffered']
    %10 = vsyncpa [#allocation3], 0
    %11 = vsyncpa [#allocation6], 0
    %12 = vsyncpa [#allocation9], 0
    %13 = vsyncpa [#allocation4], 0
    // Predicated region
    $region2: #{tpu_custom_call.1} parent=1 // pred_check
      _
    $region3: #{tpu_custom_call.1} parent=1 // pred_check_branch
      %15 = sbr.rel (0) target = $region5
    $region4: #{tpu_custom_call.1} parent=1 // pred_region
      %s17 = ssub.s32 128, 128
      %18 = vsyncadd [#allocation3], %s17
      %s20 = sshll.u32 [#allocation2], 4
      %s21 = int_to_ptr.vmem [resolvable:$true] %s20
      %23 = dma.hbm_to_vmem [thread:$0]  %s0, 128, %s21, [#allocation3]
    $region5: #{tpu_custom_call.1} parent=1 // pred_fallthru
      _
    // Predicated region
    $region6: #{tpu_custom_call.1} parent=1 // pred_check
      _
    $region7: #{tpu_custom_call.1} parent=1 // pred_check_branch
      %25 = sbr.rel (0) target = $region9
    $region8: #{tpu_custom_call.1} parent=1 // pred_region
      %s27 = ssub.s32 2048, 2048
      %28 = vsyncadd [#allocation6], %s27
      %s29 = sshll.u32 [#allocation5], 4
      %s30 = int_to_ptr.vmem [resolvable:$true] %s29
      %35 = dma.hbm_to_vmem [thread:$0]  %s1, 2048, %s30, [#allocation6], 128, 128, 8
    $region9: #{tpu_custom_call.1} parent=1 // pred_fallthru
      _
    // Predicated region
    $region10: #{tpu_custom_call.1} parent=1 // pred_check
      _
    $region11: #{tpu_custom_call.1} parent=1 // pred_check_branch
      %37 = sbr.rel (0) target = $region13
    $region12: #{tpu_custom_call.1} parent=1 // pred_region
      %s39 = ssub.s32 2048, 2048
      %40 = vsyncadd [#allocation6], %s39
      %s41 = sshll.u32 [#allocation7], 4
      %s42 = int_to_ptr.vmem [resolvable:$true] %s41
      %47 = dma.hbm_to_vmem [thread:$0]  %s2, 2048, %s42, [#allocation6], 128, 128, 8
    $region13: #{tpu_custom_call.1} parent=1 // pred_fallthru
      _
    // Predicated region
    $region14: #{tpu_custom_call.1} parent=1 // pred_check
      _
    $region15: #{tpu_custom_call.1} parent=1 // pred_check_branch
      %49 = sbr.rel (0) target = $region17
    $region16: #{tpu_custom_call.1} parent=1 // pred_region
      %s51 = ssub.s32 2048, 2048
      %52 = vsyncadd [#allocation9], %s51
      %s53 = sshll.u32 [#allocation8], 4
      %s54 = int_to_ptr.vmem [resolvable:$true] %s53
      %59 = dma.hbm_to_vmem [thread:$0]  %s3, 2048, %s54, [#allocation9], 128, 128, 8
    $region17: #{tpu_custom_call.1} parent=1 // pred_fallthru
      _
    // Predicated region
    $region18: #{tpu_custom_call.1} parent=1 // pred_check
      _
    $region19: #{tpu_custom_call.1} parent=1 // pred_check_branch
      %61 = sbr.rel (0) target = $region21
    $region20: #{tpu_custom_call.1} parent=1 // pred_region
      _
    $region21: #{tpu_custom_call.1} parent=1 // pred_fallthru
      _
    // Predicated region
    $region22: #{tpu_custom_call.1} parent=1 // pred_check
      _
    $region23: #{tpu_custom_call.1} parent=1 // pred_check_branch
      %63 = sbr.rel (0) target = $region25
    $region24: #{tpu_custom_call.1} parent=1 // pred_region
      %64 = dma.done [#allocation3], 128
    $region25: #{tpu_custom_call.1} parent=1 // pred_fallthru
      _
    // Predicated region
    $region26: #{tpu_custom_call.1} parent=1 // pred_check
      _
    $region27: #{tpu_custom_call.1} parent=1 // pred_check_branch
      %66 = sbr.rel (0) target = $region29
    $region28: #{tpu_custom_call.1} parent=1 // pred_region
      %67 = dma.done [#allocation6], 2048
    $region29: #{tpu_custom_call.1} parent=1 // pred_fallthru
      _
    // Predicated region
    $region30: #{tpu_custom_call.1} parent=1 // pred_check
      _
    $region31: #{tpu_custom_call.1} parent=1 // pred_check_branch
      %69 = sbr.rel (0) target = $region33
    $region32: #{tpu_custom_call.1} parent=1 // pred_region
      %70 = dma.done [#allocation6], 2048
    $region33: #{tpu_custom_call.1} parent=1 // pred_fallthru
      _
    // Predicated region
    $region34: #{tpu_custom_call.1} parent=1 // pred_check
      _
    $region35: #{tpu_custom_call.1} parent=1 // pred_check_branch
      %72 = sbr.rel (0) target = $region37
    $region36: #{tpu_custom_call.1} parent=1 // pred_region
      %73 = dma.done [#allocation9], 2048
    $region37: #{tpu_custom_call.1} parent=1 // pred_fallthru
      _
    %v74 = vld [vmem:[%s4] sm:$0xff]
    %v75 = vld [vmem:[#allocation2] sm:$0xff]
    %v76 = vld [vmem:[#allocation5] sm:$0xff]
    %v77 = vld [vmem:[#allocation5 + $0x8] sm:$0xff]
    %v78 = vld [vmem:[#allocation5 + $0x10] sm:$0xff]
    %v79 = vld [vmem:[#allocation5 + $0x18] sm:$0xff]
    %v80 = vld [vmem:[#allocation5 + $0x20] sm:$0xff]
    %v81 = vld [vmem:[#allocation5 + $0x28] sm:$0xff]
    %v82 = vld [vmem:[#allocation5 + $0x30] sm:$0xff]
    %v83 = vld [vmem:[#allocation5 + $0x38] sm:$0xff]
    %v84 = vld [vmem:[#allocation5 + $0x40] sm:$0xff]
    %v85 = vld [vmem:[#allocation5 + $0x48] sm:$0xff]
    %v86 = vld [vmem:[#allocation5 + $0x50] sm:$0xff]
    %v87 = vld [vmem:[#allocation5 + $0x58] sm:$0xff]
    %v88 = vld [vmem:[#allocation5 + $0x60] sm:$0xff]
    %v89 = vld [vmem:[#allocation5 + $0x68] sm:$0xff]
    %v90 = vld [vmem:[#allocation5 + $0x70] sm:$0xff]
    %v91 = vld [vmem:[#allocation5 + $0x78] sm:$0xff]
    %v92 = vlaneseq
    %v93 = vshrl.u32 %v92, 7
    %v94 = vsub.s32 0, %v93
    %v95 = vrot.slane %v74, %v94
    %96 = vmatprep.subr.mxu0 0.0
    %97 = vmatpush1.msra.mxu0 %v76
    %98 = vmatprep.subr.mxu0 0.0
    %99 = vmatpush1.msra.mxu0 %v77
    %100 = vmatprep.subr.mxu0 0.0
    %101 = vmatpush1.msra.mxu0 %v78
    %102 = vmatprep.subr.mxu0 0.0
    %103 = vmatpush1.msra.mxu0 %v79
    %104 = vmatprep.subr.mxu0 0.0
    %105 = vmatpush1.msra.mxu0 %v80
    %106 = vmatprep.subr.mxu0 0.0
    %107 = vmatpush1.msra.mxu0 %v81
    %108 = vmatprep.subr.mxu0 0.0
    %109 = vmatpush1.msra.mxu0 %v82
    %110 = vmatprep.subr.mxu0 0.0
    %111 = vmatpush1.msra.mxu0 %v83
    %112 = vmatprep.subr.mxu0 0.0
    %113 = vmatpush1.msra.mxu0 %v84
    %114 = vmatprep.subr.mxu0 0.0
    %115 = vmatpush1.msra.mxu0 %v85
    %116 = vmatprep.subr.mxu0 0.0
    %117 = vmatpush1.msra.mxu0 %v86
    %118 = vmatprep.subr.mxu0 0.0
    %119 = vmatpush1.msra.mxu0 %v87
    %120 = vmatprep.subr.mxu0 0.0
    %121 = vmatpush1.msra.mxu0 %v88
    %122 = vmatprep.subr.mxu0 0.0
    %123 = vmatpush1.msra.mxu0 %v89
    %124 = vmatprep.subr.mxu0 0.0
    %125 = vmatpush1.msra.mxu0 %v90
    %126 = vmatprep.subr.mxu0 0.0
    %127 = vmatpush1.msra.mxu0 %v91
    %128 = vmatprep.subr.mxu0 0.0
    %129 = vmatpush1.msra.mxu0 0.0
    %130 = vmatprep.subr.mxu0 0.0
    %131 = vmatpush1.msra.mxu0 0.0
    %132 = vmatprep.subr.mxu0 0.0
    %133 = vmatpush1.msra.mxu0 0.0
    %134 = vmatprep.subr.mxu0 0.0
    %135 = vmatpush1.msra.mxu0 0.0
    %136 = vmatprep.subr.mxu0 0.0
    %137 = vmatpush1.msra.mxu0 0.0
    %138 = vmatprep.subr.mxu0 0.0
    %139 = vmatpush1.msra.mxu0 0.0
    %140 = vmatprep.subr.mxu0 0.0
    %141 = vmatpush1.msra.mxu0 0.0
    %142 = vmatprep.subr.mxu0 0.0
    %143 = vmatpush1.msra.mxu0 0.0
    %144 = vmatprep.subr.mxu0 0.0
    %145 = vmatpush1.msra.mxu0 0.0
    %146 = vmatprep.subr.mxu0 0.0
    %147 = vmatpush1.msra.mxu0 0.0
    %148 = vmatprep.subr.mxu0 0.0
    %149 = vmatpush1.msra.mxu0 0.0
    %150 = vmatprep.subr.mxu0 0.0
    %151 = vmatpush1.msra.mxu0 0.0
    %152 = vmatprep.subr.mxu0 0.0
    %153 = vmatpush1.msra.mxu0 0.0
    %154 = vmatprep.subr.mxu0 0.0
    %155 = vmatpush1.msra.mxu0 0.0
    %156 = vmatprep.subr.mxu0 0.0
    %157 = vmatpush1.msra.mxu0 0.0
    %158 = vmatprep.subr.mxu0 0.0
    %159 = vmatpush1.msra.mxu0 0.0
    %160 = vmatprep.mubr.f32.mxu0 0.0
    %161 = vmatmul.mubr.f32.gmra.mrb[0].mxu0 %v75
    %v162 = vpop.f32.mrb[0].mxu0
    %v163 = vadd.f32 %v95, %v162
    %v164 = vpop.f32.mrb[0].mxu0
    %165 = vdwg.mxu0
    %v166 = vtanh.pop %v163
    %v167 = vld [vmem:[#allocation7] sm:$0xff]
    %v168 = vld [vmem:[#allocation7 + $0x8] sm:$0xff]
    %v169 = vld [vmem:[#allocation7 + $0x10] sm:$0xff]
    %v170 = vld [vmem:[#allocation7 + $0x18] sm:$0xff]
    %v171 = vld [vmem:[#allocation7 + $0x20] sm:$0xff]
    %v172 = vld [vmem:[#allocation7 + $0x28] sm:$0xff]
    %v173 = vld [vmem:[#allocation7 + $0x30] sm:$0xff]
    %v174 = vld [vmem:[#allocation7 + $0x38] sm:$0xff]
    %v175 = vld [vmem:[#allocation7 + $0x40] sm:$0xff]
    %v176 = vld [vmem:[#allocation7 + $0x48] sm:$0xff]
    %v177 = vld [vmem:[#allocation7 + $0x50] sm:$0xff]
    %v178 = vld [vmem:[#allocation7 + $0x58] sm:$0xff]
    %v179 = vld [vmem:[#allocation7 + $0x60] sm:$0xff]
    %v180 = vld [vmem:[#allocation7 + $0x68] sm:$0xff]
    %v181 = vld [vmem:[#allocation7 + $0x70] sm:$0xff]
    %v182 = vld [vmem:[#allocation7 + $0x78] sm:$0xff]
    %v183 = vlaneseq
    %v184 = vshrl.u32 %v183, 7
    %v185 = vsub.s32 1, %v184
    %v186 = vrot.slane %v74, %v185
    %187 = vmatprep.subr.mxu0 0.0
    %188 = vmatpush1.msra.mxu0 %v167
    %189 = vmatprep.subr.mxu0 0.0
    %190 = vmatpush1.msra.mxu0 %v168
    %191 = vmatprep.subr.mxu0 0.0
    %192 = vmatpush1.msra.mxu0 %v169
    %193 = vmatprep.subr.mxu0 0.0
    %194 = vmatpush1.msra.mxu0 %v170
    %195 = vmatprep.subr.mxu0 0.0
    %196 = vmatpush1.msra.mxu0 %v171
    %197 = vmatprep.subr.mxu0 0.0
    %198 = vmatpush1.msra.mxu0 %v172
    %199 = vmatprep.subr.mxu0 0.0
    %200 = vmatpush1.msra.mxu0 %v173
    %201 = vmatprep.subr.mxu0 0.0
    %202 = vmatpush1.msra.mxu0 %v174
    %203 = vmatprep.subr.mxu0 0.0
    %204 = vmatpush1.msra.mxu0 %v175
    %205 = vmatprep.subr.mxu0 0.0
    %206 = vmatpush1.msra.mxu0 %v176
    %207 = vmatprep.subr.mxu0 0.0
    %208 = vmatpush1.msra.mxu0 %v177
    %209 = vmatprep.subr.mxu0 0.0
    %210 = vmatpush1.msra.mxu0 %v178
    %211 = vmatprep.subr.mxu0 0.0
    %212 = vmatpush1.msra.mxu0 %v179
    %213 = vmatprep.subr.mxu0 0.0
    %214 = vmatpush1.msra.mxu0 %v180
    %215 = vmatprep.subr.mxu0 0.0
    %216 = vmatpush1.msra.mxu0 %v181
    %217 = vmatprep.subr.mxu0 0.0
    %218 = vmatpush1.msra.mxu0 %v182
    %219 = vmatprep.subr.mxu0 0.0
    %220 = vmatpush1.msra.mxu0 0.0
    %221 = vmatprep.subr.mxu0 0.0
    %222 = vmatpush1.msra.mxu0 0.0
    %223 = vmatprep.subr.mxu0 0.0
    %224 = vmatpush1.msra.mxu0 0.0
    %225 = vmatprep.subr.mxu0 0.0
    %226 = vmatpush1.msra.mxu0 0.0
    %227 = vmatprep.subr.mxu0 0.0
    %228 = vmatpush1.msra.mxu0 0.0
    %229 = vmatprep.subr.mxu0 0.0
    %230 = vmatpush1.msra.mxu0 0.0
    %231 = vmatprep.subr.mxu0 0.0
    %232 = vmatpush1.msra.mxu0 0.0
    %233 = vmatprep.subr.mxu0 0.0
    %234 = vmatpush1.msra.mxu0 0.0
    %235 = vmatprep.subr.mxu0 0.0
    %236 = vmatpush1.msra.mxu0 0.0
    %237 = vmatprep.subr.mxu0 0.0
    %238 = vmatpush1.msra.mxu0 0.0
    %239 = vmatprep.subr.mxu0 0.0
    %240 = vmatpush1.msra.mxu0 0.0
    %241 = vmatprep.subr.mxu0 0.0
    %242 = vmatpush1.msra.mxu0 0.0
    %243 = vmatprep.subr.mxu0 0.0
    %244 = vmatpush1.msra.mxu0 0.0
    %245 = vmatprep.subr.mxu0 0.0
    %246 = vmatpush1.msra.mxu0 0.0
    %247 = vmatprep.subr.mxu0 0.0
    %248 = vmatpush1.msra.mxu0 0.0
    %249 = vmatprep.subr.mxu0 0.0
    %250 = vmatpush1.msra.mxu0 0.0
    %251 = vmatprep.mubr.f32.mxu0 0.0
    %252 = vmatmul.mubr.f32.gmra.mrb[0].mxu0 %v166
    %v253 = vpop.f32.mrb[0].mxu0
    %v254 = vadd.f32 %v186, %v253
    %v255 = vpop.f32.mrb[0].mxu0
    %256 = vdwg.mxu0
    %v257 = vtanh.pop %v254
    %v258 = vld [vmem:[#allocation8] sm:$0xff]
    %v259 = vld [vmem:[#allocation8 + $0x8] sm:$0xff]
    %v260 = vld [vmem:[#allocation8 + $0x10] sm:$0xff]
    %v261 = vld [vmem:[#allocation8 + $0x18] sm:$0xff]
    %v262 = vld [vmem:[#allocation8 + $0x20] sm:$0xff]
    %v263 = vld [vmem:[#allocation8 + $0x28] sm:$0xff]
    %v264 = vld [vmem:[#allocation8 + $0x30] sm:$0xff]
    %v265 = vld [vmem:[#allocation8 + $0x38] sm:$0xff]
    %v266 = vld [vmem:[#allocation8 + $0x40] sm:$0xff]
    %v267 = vld [vmem:[#allocation8 + $0x48] sm:$0xff]
    %v268 = vld [vmem:[#allocation8 + $0x50] sm:$0xff]
    %v269 = vld [vmem:[#allocation8 + $0x58] sm:$0xff]
    %v270 = vld [vmem:[#allocation8 + $0x60] sm:$0xff]
    %v271 = vld [vmem:[#allocation8 + $0x68] sm:$0xff]
    %v272 = vld [vmem:[#allocation8 + $0x70] sm:$0xff]
    %v273 = vld [vmem:[#allocation8 + $0x78] sm:$0xff]
    %v274 = vlaneseq
    %v275 = vshrl.u32 %v274, 7
    %v276 = vsub.s32 2, %v275
    %v277 = vrot.slane %v74, %v276
    %278 = vmatprep.subr.mxu0 0.0
    %279 = vmatpush1.msra.mxu0 %v258
    %280 = vmatprep.subr.mxu0 0.0
    %281 = vmatpush1.msra.mxu0 %v259
    %282 = vmatprep.subr.mxu0 0.0
    %283 = vmatpush1.msra.mxu0 %v260
    %284 = vmatprep.subr.mxu0 0.0
    %285 = vmatpush1.msra.mxu0 %v261
    %286 = vmatprep.subr.mxu0 0.0
    %287 = vmatpush1.msra.mxu0 %v262
    %288 = vmatprep.subr.mxu0 0.0
    %289 = vmatpush1.msra.mxu0 %v263
    %290 = vmatprep.subr.mxu0 0.0
    %291 = vmatpush1.msra.mxu0 %v264
    %292 = vmatprep.subr.mxu0 0.0
    %293 = vmatpush1.msra.mxu0 %v265
    %294 = vmatprep.subr.mxu0 0.0
    %295 = vmatpush1.msra.mxu0 %v266
    %296 = vmatprep.subr.mxu0 0.0
    %297 = vmatpush1.msra.mxu0 %v267
    %298 = vmatprep.subr.mxu0 0.0
    %299 = vmatpush1.msra.mxu0 %v268
    %300 = vmatprep.subr.mxu0 0.0
    %301 = vmatpush1.msra.mxu0 %v269
    %302 = vmatprep.subr.mxu0 0.0
    %303 = vmatpush1.msra.mxu0 %v270
    %304 = vmatprep.subr.mxu0 0.0
    %305 = vmatpush1.msra.mxu0 %v271
    %306 = vmatprep.subr.mxu0 0.0
    %307 = vmatpush1.msra.mxu0 %v272
    %308 = vmatprep.subr.mxu0 0.0
    %309 = vmatpush1.msra.mxu0 %v273
    %310 = vmatprep.subr.mxu0 0.0
    %311 = vmatpush1.msra.mxu0 0.0
    %312 = vmatprep.subr.mxu0 0.0
    %313 = vmatpush1.msra.mxu0 0.0
    %314 = vmatprep.subr.mxu0 0.0
    %315 = vmatpush1.msra.mxu0 0.0
    %316 = vmatprep.subr.mxu0 0.0
    %317 = vmatpush1.msra.mxu0 0.0
    %318 = vmatprep.subr.mxu0 0.0
    %319 = vmatpush1.msra.mxu0 0.0
    %320 = vmatprep.subr.mxu0 0.0
    %321 = vmatpush1.msra.mxu0 0.0
    %322 = vmatprep.subr.mxu0 0.0
    %323 = vmatpush1.msra.mxu0 0.0
    %324 = vmatprep.subr.mxu0 0.0
    %325 = vmatpush1.msra.mxu0 0.0
    %326 = vmatprep.subr.mxu0 0.0
    %327 = vmatpush1.msra.mxu0 0.0
    %328 = vmatprep.subr.mxu0 0.0
    %329 = vmatpush1.msra.mxu0 0.0
    %330 = vmatprep.subr.mxu0 0.0
    %331 = vmatpush1.msra.mxu0 0.0
    %332 = vmatprep.subr.mxu0 0.0
    %333 = vmatpush1.msra.mxu0 0.0
    %334 = vmatprep.subr.mxu0 0.0
    %335 = vmatpush1.msra.mxu0 0.0
    %336 = vmatprep.subr.mxu0 0.0
    %337 = vmatpush1.msra.mxu0 0.0
    %338 = vmatprep.subr.mxu0 0.0
    %339 = vmatpush1.msra.mxu0 0.0
    %340 = vmatprep.subr.mxu0 0.0
    %341 = vmatpush1.msra.mxu0 0.0
    %342 = vmatprep.mubr.f32.mxu0 0.0
    %343 = vmatmul.mubr.f32.gmra.mrb[0].mxu0 %v257
    %v344 = vpop.f32.mrb[0].mxu0
    %v345 = vadd.f32 %v277, %v344
    %v346 = vpop.f32.mrb[0].mxu0
    %347 = vdwg.mxu0
    %v348 = vtanh.pop %v345
    %v349 = vlaneseq
    %v350 = vshrl.u32 %v349, 7
    %v351 = vsub.s32 3, %v350
    %v352 = vrot.slane %v74, %v351
    %v353 = vmul.f32 %v352, %v348
    %v354 = vmax.f32 %v345, -20.0
    %v355 = vmin.f32 %v354, 2.0
    %v356 = vmul.f32 %v355, 1.442695
    %v357 = vpow.pop %v356
    %v358 = vlaneseq
    %v359 = vand.u32 %v358, 127
    %vm360 = vcmp.lt.s32.totalorder %v359, 4
    %vm361 = vcmp.lt.s32.totalorder %v359, 8
    %v362 = vsel %vm361, %v357, %v345
    %v363 = vsel %vm360, %v353, %v362
    %364 = vst [vmem:[#allocation10] sm:$0xff] %v363
    // Predicated region
    $region38: #{tpu_custom_call.1} parent=1 // pred_check
      _
    $region39: #{tpu_custom_call.1} parent=1 // pred_check_branch
      %366 = sbr.rel (0) target = $region41
    $region40: #{tpu_custom_call.1} parent=1 // pred_region
      %s368 = ssub.s32 128, 128
      %369 = vsyncadd [#allocation4], %s368
      %s371 = sshll.u32 [#allocation10], 4
      %s372 = int_to_ptr.vmem [resolvable:$true] %s371
      %374 = dma.vmem_to_hbm [thread:$0]  %s372, 128, %s5, [#allocation4]
    $region41: #{tpu_custom_call.1} parent=1 // pred_fallthru
      _
    // Predicated region
    $region42: #{tpu_custom_call.1} parent=1 // pred_check
      _
    $region43: #{tpu_custom_call.1} parent=1 // pred_check_branch
      %376 = sbr.rel (0) target = $region45
    $region44: #{tpu_custom_call.1} parent=1 // pred_region
      %377 = dma.done [#allocation4], 128
    $region45: #{tpu_custom_call.1} parent=1 // pred_fallthru
      _
    %378 = vsyncpa [#allocation3], 1
    %379 = vsyncpa [#allocation6], 1
    %380 = vsyncpa [#allocation9], 1
    %381 = vsyncpa [#allocation4], 1

</llo_original>
